<compile_context>
chip_gen: v7x
topology: tpu7x:2x2x1
jax: 0.10.0
libtpu: 0.0.40
codegen_flags: <defaults>
</compile_context>

<pallas_src>
import functools

import jax
import jax.numpy as jnp
from jax.experimental import pallas as pl
from jax.experimental.pallas import tpu as pltpu


def _vae_encoder_kernel(x_ref, w_in_ref, b_in_ref, w_heads_ref, b_heads_ref,
                        eps_ref, out_ref, *, latent_dim):
    """Fused VAE-encoder forward for one batch tile.

    x_ref:       (bm, D)   bf16 flattened input
    w_in_ref:    (D, H)    bf16 FC_input weight (pre-transposed)
    b_in_ref:    (1, H)    f32  FC_input bias
    w_heads_ref: (H, 2L)   bf16 [FC_mean | FC_var] weights (pre-transposed, packed)
    b_heads_ref: (1, 2L)   f32  packed head biases
    eps_ref:     (bm, L)   f32  N(0,1) noise for reparameterization
    out_ref:     (bm, 3L)  f32  packed [z | mean | log_var]
    """
    L = latent_dim

    # FC_input: bf16 MXU operands, f32 accumulation. LeakyReLU(0.2) in f32 (VPU).
    h = jnp.dot(x_ref[...], w_in_ref[...],
                preferred_element_type=jnp.float32) + b_in_ref[...]
    h = jnp.where(h > 0, h, 0.2 * h)

    # Both heads in a single MXU push: (bm, H) @ (H, 2L) -> (bm, 2L).
    heads = jnp.dot(h.astype(jnp.bfloat16), w_heads_ref[...],
                    preferred_element_type=jnp.float32) + b_heads_ref[...]
    mean = heads[:, :L]          # static lane slices within one vreg
    log_var = heads[:, L:]

    # Reparameterization: z = mean + exp(0.5*log_var) * eps   (exp -> EUP, f32)
    std = jnp.exp(0.5 * log_var)
    z = mean + std * eps_ref[...]

    # Single lane-packed store: [z | mean | log_var].
    out_ref[...] = jnp.concatenate([z, mean, log_var], axis=-1)


def prepare_params(params):
    """One-time (load-time) packing: transpose, pack heads, cast MXU operands to bf16.

    params: PyTorch-layout weights
        w_in (H, D), b_in (H,), w_mean (L, H), b_mean (L,), w_var (L, H), b_var (L,)
    """
    H, D = params["w_in"].shape
    L = params["w_mean"].shape[0]
    w_in_t = jnp.asarray(params["w_in"], jnp.float32).T.astype(jnp.bfloat16)   # (D, H)
    b_in = jnp.asarray(params["b_in"], jnp.float32).reshape(1, H)
    w_heads_t = jnp.concatenate(
        [jnp.asarray(params["w_mean"], jnp.float32).T,
         jnp.asarray(params["w_var"], jnp.float32).T],
        axis=1).astype(jnp.bfloat16)                                            # (H, 2L)
    b_heads = jnp.concatenate(
        [jnp.asarray(params["b_mean"], jnp.float32),
         jnp.asarray(params["b_var"], jnp.float32)]).reshape(1, 2 * L)
    return {"w_in_t": w_in_t, "b_in": b_in,
            "w_heads_t": w_heads_t, "b_heads": b_heads,
            "dims": (D, H, L)}


def ann_encoder_vae_forward(x, eps, prepared, *, block_b=None):
    """Forward pass of ANN_Encoder_vae. Returns (z, mean, log_var) in f32."""
    D, H, L = prepared["dims"]
    B = x.shape[0]
    x2 = x.reshape(B, -1).astype(jnp.bfloat16)          # flatten(start_dim=1) + MXU dtype
    eps = jnp.asarray(eps, jnp.float32).reshape(B, L)

    # Batch tiling: default = whole batch in one grid step (launch-latency bound
    # at small B). If tiled, enforce sublane-multiple tiles and prefer big tiles.
    if block_b is None or block_b >= B:
        block_b = B
    else:
        block_b = max(8, (block_b // 8) * 8)
    grid = (pl.cdiv(B, block_b),)

    batch_map = lambda i: (i, 0)
    const_map = lambda i: (0, 0)

    in_specs = [
        pl.BlockSpec((block_b, D), batch_map),   # x (bf16)
        pl.BlockSpec((D, H), const_map),         # w_in_t (bf16, VMEM-resident)
        pl.BlockSpec((1, H), const_map),         # b_in (f32)
        pl.BlockSpec((H, 2 * L), const_map),     # w_heads_t (bf16)
        pl.BlockSpec((1, 2 * L), const_map),     # b_heads (f32)
        pl.BlockSpec((block_b, L), batch_map),   # eps (f32)
    ]
    out_specs = pl.BlockSpec((block_b, 3 * L), batch_map)
    out_shape = jax.ShapeDtypeStruct((B, 3 * L), jnp.float32)

    flops = 2 * B * (D * H + H * 2 * L) + 8 * B * L
    bytes_accessed = (2 * (B * D + D * H + H * 2 * L)            # bf16 x + weights
                      + 4 * (H + 2 * L + B * L + B * 3 * L))     # f32 biases, eps, out
    cost = pl.CostEstimate(flops=flops, transcendentals=B * L,
                           bytes_accessed=bytes_accessed)

    packed = pl.pallas_call(
        functools.partial(_vae_encoder_kernel, latent_dim=L),
        grid=grid,
        in_specs=in_specs,
        out_specs=out_specs,
        out_shape=out_shape,
        compiler_params=pltpu.CompilerParams(
            dimension_semantics=("parallel",)),
        cost_estimate=cost,
    )(x2, prepared["w_in_t"], prepared["b_in"],
      prepared["w_heads_t"], prepared["b_heads"], eps)

    z = packed[:, :L]
    mean = packed[:, L:2 * L]
    log_var = packed[:, 2 * L:]
    return z, mean, log_var


def ann_encoder_vae_reference(x, eps, params):
    """Plain-JAX f32 reference reproducing the PyTorch forward (same eps)."""
    B = x.shape[0]
    x2 = x.reshape(B, -1).astype(jnp.float32)
    h = x2 @ params["w_in"].T + params["b_in"]
    h = jnp.where(h > 0, h, 0.2 * h)                     # LeakyReLU(0.2)
    mean = h @ params["w_mean"].T + params["b_mean"]
    log_var = h @ params["w_var"].T + params["b_var"]
    std = jnp.exp(0.5 * log_var)
    z = mean + std * eps
    return z, mean, log_var


def make_params(key, input_dim, hidden_dim, latent_dim):
    scale = 0.05
    key, k1, k2, k3, k4, k5, k6 = jax.random.split(key, 7)
    return {
        "w_in": scale * jax.random.normal(k1, (hidden_dim, input_dim), jnp.float32),
        "b_in": scale * jax.random.normal(k2, (hidden_dim,), jnp.float32),
        "w_mean": scale * jax.random.normal(k3, (latent_dim, hidden_dim), jnp.float32),
        "b_mean": scale * jax.random.normal(k4, (latent_dim,), jnp.float32),
        "w_var": scale * jax.random.normal(k5, (latent_dim, hidden_dim), jnp.float32),
        "b_var": scale * jax.random.normal(k6, (latent_dim,), jnp.float32),
    }


if __name__ == "__main__":
    # Small shapes consistent with the module: x is (B, C, H, W) -> flattened.
    B, C, S = 2, 4, 16
    input_dim = C * S * S          # 1024
    hidden_dim = 32
    latent_dim = 16

    key = jax.random.PRNGKey(0)
    key, kx, ke = jax.random.split(key, 3)
    x = jax.random.normal(kx, (B, C, S, S), jnp.float32)
    eps = jax.random.normal(ke, (B, latent_dim), jnp.float32)   # torch.randn_like(var)
    params = make_params(key, input_dim, hidden_dim, latent_dim)

    prepared = prepare_params(params)       # one-time: transpose / pack / bf16 cast
    z, mean, log_var = ann_encoder_vae_forward(x, eps, prepared)
    z = jax.block_until_ready(z)
    mean = jax.block_until_ready(mean)
    log_var = jax.block_until_ready(log_var)

    z_ref, mean_ref, lv_ref = ann_encoder_vae_reference(x, eps, params)

    assert z.shape == (B, latent_dim), z.shape
    assert mean.shape == (B, latent_dim), mean.shape
    assert log_var.shape == (B, latent_dim), log_var.shape
    # bf16 MXU operands with f32 accumulation -> ~1e-3 relative error vs f32 ref.
    assert jnp.allclose(mean, mean_ref, atol=2e-2, rtol=2e-2), \
        float(jnp.max(jnp.abs(mean - mean_ref)))
    assert jnp.allclose(log_var, lv_ref, atol=2e-2, rtol=2e-2), \
        float(jnp.max(jnp.abs(log_var - lv_ref)))
    assert jnp.allclose(z, z_ref, atol=2e-2, rtol=2e-2), \
        float(jnp.max(jnp.abs(z - z_ref)))
    print("KERNEL_OK")
</pallas_src>

<mosaic_0001>
module attributes {stable_mosaic.version = 11 : i64} {
  func.func @_vae_encoder_kernel(%arg0: i32, %arg1: memref<2x1024xbf16, #tpu.memory_space<vmem>>, %arg2: memref<1024x32xbf16, #tpu.memory_space<vmem>>, %arg3: memref<1x32xf32, #tpu.memory_space<vmem>>, %arg4: memref<32x32xbf16, #tpu.memory_space<vmem>>, %arg5: memref<1x32xf32, #tpu.memory_space<vmem>>, %arg6: memref<2x16xf32, #tpu.memory_space<vmem>>, %arg7: memref<2x48xf32, #tpu.memory_space<vmem>>) attributes {dimension_semantics = [#tpu.dimension_semantics<parallel>], iteration_bounds = array<i64: 1>, scalar_prefetch = 0 : i64, scratch_operands = 0 : i64, tpu.core_type = #tpu.core_type<tc>, window_params = [{transform_indices = @transform_0, window_bounds = array<i64: 2, 1024>}, {pipeline_mode = #tpu.pipeline_mode<synchronous>, transform_indices = @transform_1, window_bounds = array<i64: 1024, 32>}, {pipeline_mode = #tpu.pipeline_mode<synchronous>, transform_indices = @transform_2, window_bounds = array<i64: 1, 32>}, {pipeline_mode = #tpu.pipeline_mode<synchronous>, transform_indices = @transform_3, window_bounds = array<i64: 32, 32>}, {pipeline_mode = #tpu.pipeline_mode<synchronous>, transform_indices = @transform_4, window_bounds = array<i64: 1, 32>}, {transform_indices = @transform_5, window_bounds = array<i64: 2, 16>}, {transform_indices = @transform_6, window_bounds = array<i64: 2, 48>}]} {
    %c0 = arith.constant 0 : index
    %c0_0 = arith.constant 0 : index
    %0 = vector.load %arg1[%c0, %c0_0] : memref<2x1024xbf16, #tpu.memory_space<vmem>>, vector<2x1024xbf16>
    %c0_1 = arith.constant 0 : index
    %c0_2 = arith.constant 0 : index
    %1 = vector.load %arg2[%c0_1, %c0_2] : memref<1024x32xbf16, #tpu.memory_space<vmem>>, vector<1024x32xbf16>
    %cst = arith.constant dense<0.000000e+00> : vector<2x32xf32>
    %2 = tpu.matmul %0, %1, %cst {dimension_numbers = #tpu.dot_dimension_numbers<[1], [0], [0], [1], [0, 0, 1, 1], [], []>} : vector<2x1024xbf16>, vector<1024x32xbf16>, vector<2x32xf32> -> vector<2x32xf32>
    %c0_3 = arith.constant 0 : index
    %c0_4 = arith.constant 0 : index
    %3 = vector.load %arg3[%c0_3, %c0_4] : memref<1x32xf32, #tpu.memory_space<vmem>>, vector<1x32xf32>
    %4 = vector.broadcast %3 : vector<1x32xf32> to vector<2x32xf32>
    %5 = arith.addf %2, %4 : vector<2x32xf32>
    %cst_5 = arith.constant 0.000000e+00 : f32
    %6 = vector.broadcast %cst_5 : f32 to vector<2x32xf32>
    %7 = arith.cmpf ogt, %5, %6 : vector<2x32xf32>
    %cst_6 = arith.constant 2.000000e-01 : f32
    %8 = vector.broadcast %cst_6 : f32 to vector<2x32xf32>
    %9 = arith.mulf %8, %5 : vector<2x32xf32>
    %10 = arith.select %7, %5, %9 : vector<2x32xi1>, vector<2x32xf32>
    %11 = arith.truncf %10 : vector<2x32xf32> to vector<2x32xbf16>
    %c0_7 = arith.constant 0 : index
    %c0_8 = arith.constant 0 : index
    %12 = vector.load %arg4[%c0_7, %c0_8] : memref<32x32xbf16, #tpu.memory_space<vmem>>, vector<32x32xbf16>
    %cst_9 = arith.constant dense<0.000000e+00> : vector<2x32xf32>
    %13 = tpu.matmul %11, %12, %cst_9 {dimension_numbers = #tpu.dot_dimension_numbers<[1], [0], [0], [1], [0, 0, 1, 1], [], []>} : vector<2x32xbf16>, vector<32x32xbf16>, vector<2x32xf32> -> vector<2x32xf32>
    %c0_10 = arith.constant 0 : index
    %c0_11 = arith.constant 0 : index
    %14 = vector.load %arg5[%c0_10, %c0_11] : memref<1x32xf32, #tpu.memory_space<vmem>>, vector<1x32xf32>
    %15 = vector.broadcast %14 : vector<1x32xf32> to vector<2x32xf32>
    %16 = arith.addf %13, %15 : vector<2x32xf32>
    %17 = vector.extract_strided_slice %16 {offsets = [0, 0], sizes = [2, 16], strides = [1, 1]} : vector<2x32xf32> to vector<2x16xf32>
    %18 = vector.extract_strided_slice %16 {offsets = [0, 16], sizes = [2, 16], strides = [1, 1]} : vector<2x32xf32> to vector<2x16xf32>
    %cst_12 = arith.constant 5.000000e-01 : f32
    %19 = vector.broadcast %cst_12 : f32 to vector<2x16xf32>
    %20 = arith.mulf %19, %18 : vector<2x16xf32>
    %21 = math.exp %20 : vector<2x16xf32>
    %c0_13 = arith.constant 0 : index
    %c0_14 = arith.constant 0 : index
    %22 = vector.load %arg6[%c0_13, %c0_14] : memref<2x16xf32, #tpu.memory_space<vmem>>, vector<2x16xf32>
    %23 = arith.mulf %21, %22 : vector<2x16xf32>
    %24 = arith.addf %17, %23 : vector<2x16xf32>
    %25 = tpu.concatenate %24, %17, %18 in 1 : vector<2x16xf32>, vector<2x16xf32>, vector<2x16xf32> -> vector<2x48xf32>
    %c0_15 = arith.constant 0 : index
    %c0_16 = arith.constant 0 : index
    %26 = vector.load %arg7[%c0_15, %c0_16] : memref<2x48xf32, #tpu.memory_space<vmem>>, vector<2x48xf32>
    tpu.vector_store %arg7[%c0_15, %c0_16], %25 {strides = array<i32>} : memref<2x48xf32, #tpu.memory_space<vmem>>, vector<2x48xf32>,
    return
  }
  func.func @transform_0(%arg0: i32) -> (i32, i32) {
    %c0_i32 = arith.constant 0 : i32
    %c0_i32_0 = arith.constant 0 : i32
    return %arg0, %c0_i32 : i32, i32
  }
  func.func @transform_1(%arg0: i32) -> (i32, i32) {
    %c0_i32 = arith.constant 0 : i32
    %c0_i32_0 = arith.constant 0 : i32
    %c0_i32_1 = arith.constant 0 : i32
    return %c0_i32, %c0_i32_0 : i32, i32
  }
  func.func @transform_2(%arg0: i32) -> (i32, i32) {
    %c0_i32 = arith.constant 0 : i32
    %c0_i32_0 = arith.constant 0 : i32
    %c0_i32_1 = arith.constant 0 : i32
    return %c0_i32, %c0_i32_0 : i32, i32
  }
  func.func @transform_3(%arg0: i32) -> (i32, i32) {
    %c0_i32 = arith.constant 0 : i32
    %c0_i32_0 = arith.constant 0 : i32
    %c0_i32_1 = arith.constant 0 : i32
    return %c0_i32, %c0_i32_0 : i32, i32
  }
  func.func @transform_4(%arg0: i32) -> (i32, i32) {
    %c0_i32 = arith.constant 0 : i32
    %c0_i32_0 = arith.constant 0 : i32
    %c0_i32_1 = arith.constant 0 : i32
    return %c0_i32, %c0_i32_0 : i32, i32
  }
  func.func @transform_5(%arg0: i32) -> (i32, i32) {
    %c0_i32 = arith.constant 0 : i32
    %c0_i32_0 = arith.constant 0 : i32
    return %arg0, %c0_i32 : i32, i32
  }
  func.func @transform_6(%arg0: i32) -> (i32, i32) {
    %c0_i32 = arith.constant 0 : i32
    %c0_i32_0 = arith.constant 0 : i32
    return %arg0, %c0_i32 : i32, i32
  }
}

</mosaic_0001>

<llo_original>
// kernel: tpu_custom_call.1
$region0: #{tpu_custom_call.1}
  #allocation0 [shape = 'u32[]', space=smem, size = 0x4, offset = 0x4, fixed_abs, tag = 'smem constant byte address 0x4 - core index']
  #allocation1 [shape = 'u32[144,128]{1,0:T(1,128)}', space=vmem, size = 0x12000, scoped, tag = 'internal scratch']
  %s0 = inlined_call_operand.vmem [shape: bf16[2,1024], index: 0, kind: input, shape index: {}]
  %s1 = inlined_call_operand.vmem [shape: bf16[1024,32], index: 1, kind: input, shape index: {}]
  %s2 = inlined_call_operand.vmem [shape: f32[1,32], index: 2, kind: input, shape index: {}]
  %s3 = inlined_call_operand.vmem [shape: bf16[32,32], index: 3, kind: input, shape index: {}]
  %s4 = inlined_call_operand.vmem [shape: f32[1,32], index: 4, kind: input, shape index: {}]
  %s5 = inlined_call_operand.vmem [shape: f32[2,16], index: 5, kind: input, shape index: {}]
  %s6 = inlined_call_operand.hbm [shape: f32[2,48], index: 6, kind: output, shape index: {}]
  %s7 = sld [smem:[#allocation0]]
  $region34: #{tpu_custom_call.1} parent=0
    _
  %s9 = ssub.s32 1, %s7
  %s10 = scalar_select 0, %s9, %s7
  $region1: #{tpu_custom_call.1} parent=0
    #allocation2 [shape = 'u8[1024]{0}', space=vmem, size = 0x400, scoped, tag = 'output window, operand 0, single buffered']
    #allocation3 [shape = 's32[1]{0}', space=sflag, size = 0x4, scoped, tag = 'scoped memory for tpu_custom_call.1']
    %11 = vsyncpa [#allocation3], 0
    // Predicated region
    $region2: #{tpu_custom_call.1} parent=1 // pred_check
      _
    $region3: #{tpu_custom_call.1} parent=1 // pred_check_branch
      %13 = sbr.rel (0) target = $region5
    $region4: #{tpu_custom_call.1} parent=1 // pred_region
      _
    $region5: #{tpu_custom_call.1} parent=1 // pred_fallthru
      _
    // Predicated region
    $region6: #{tpu_custom_call.1} parent=1 // pred_check
      _
    $region7: #{tpu_custom_call.1} parent=1 // pred_check_branch
      %15 = sbr.rel (0) target = $region9
    $region8: #{tpu_custom_call.1} parent=1 // pred_region
      _
    $region9: #{tpu_custom_call.1} parent=1 // pred_fallthru
      _
    // Predicated region
    $region10: #{tpu_custom_call.1} parent=1 // pred_check
      _
    $region11: #{tpu_custom_call.1} parent=1 // pred_check_branch
      %17 = sbr.rel (0) target = $region13
    $region12: #{tpu_custom_call.1} parent=1 // pred_region
      _
    $region13: #{tpu_custom_call.1} parent=1 // pred_fallthru
      _
    // Predicated region
    $region14: #{tpu_custom_call.1} parent=1 // pred_check
      _
    $region15: #{tpu_custom_call.1} parent=1 // pred_check_branch
      %19 = sbr.rel (0) target = $region17
    $region16: #{tpu_custom_call.1} parent=1 // pred_region
      _
    $region17: #{tpu_custom_call.1} parent=1 // pred_fallthru
      _
    // Predicated region
    $region18: #{tpu_custom_call.1} parent=1 // pred_check
      _
    $region19: #{tpu_custom_call.1} parent=1 // pred_check_branch
      %21 = sbr.rel (0) target = $region21
    $region20: #{tpu_custom_call.1} parent=1 // pred_region
      _
    $region21: #{tpu_custom_call.1} parent=1 // pred_fallthru
      _
    // Predicated region
    $region22: #{tpu_custom_call.1} parent=1 // pred_check
      _
    $region23: #{tpu_custom_call.1} parent=1 // pred_check_branch
      %23 = sbr.rel (0) target = $region25
    $region24: #{tpu_custom_call.1} parent=1 // pred_region
      _
    $region25: #{tpu_custom_call.1} parent=1 // pred_fallthru
      _
    %v25 = vld [vmem:[%s0] sm:$0xff]
    %v26 = vld [vmem:[%s1] sm:$0xf]
    %v27 = vld [vmem:[%s1 + $0x4] sm:$0xf]
    %v28 = vld [vmem:[%s1 + $0x8] sm:$0xf]
    %v29 = vld [vmem:[%s1 + $0xc] sm:$0xf]
    %v30 = vld [vmem:[%s1 + $0x10] sm:$0xf]
    %v31 = vld [vmem:[%s1 + $0x14] sm:$0xf]
    %v32 = vld [vmem:[%s1 + $0x18] sm:$0xf]
    %v33 = vld [vmem:[%s1 + $0x1c] sm:$0xf]
    %v34 = vld [vmem:[%s1 + $0x20] sm:$0xf]
    %v35 = vld [vmem:[%s1 + $0x24] sm:$0xf]
    %v36 = vld [vmem:[%s1 + $0x28] sm:$0xf]
    %v37 = vld [vmem:[%s1 + $0x2c] sm:$0xf]
    %v38 = vld [vmem:[%s1 + $0x30] sm:$0xf]
    %v39 = vld [vmem:[%s1 + $0x34] sm:$0xf]
    %v40 = vld [vmem:[%s1 + $0x38] sm:$0xf]
    %v41 = vld [vmem:[%s1 + $0x3c] sm:$0xf]
    %v42 = vld [vmem:[%s1 + $0x40] sm:$0xf]
    %v43 = vld [vmem:[%s1 + $0x44] sm:$0xf]
    %v44 = vld [vmem:[%s1 + $0x48] sm:$0xf]
    %v45 = vld [vmem:[%s1 + $0x4c] sm:$0xf]
    %v46 = vld [vmem:[%s1 + $0x50] sm:$0xf]
    %v47 = vld [vmem:[%s1 + $0x54] sm:$0xf]
    %v48 = vld [vmem:[%s1 + $0x58] sm:$0xf]
    %v49 = vld [vmem:[%s1 + $0x5c] sm:$0xf]
    %v50 = vld [vmem:[%s1 + $0x60] sm:$0xf]
    %v51 = vld [vmem:[%s1 + $0x64] sm:$0xf]
    %v52 = vld [vmem:[%s1 + $0x68] sm:$0xf]
    %v53 = vld [vmem:[%s1 + $0x6c] sm:$0xf]
    %v54 = vld [vmem:[%s1 + $0x70] sm:$0xf]
    %v55 = vld [vmem:[%s1 + $0x74] sm:$0xf]
    %v56 = vld [vmem:[%s1 + $0x78] sm:$0xf]
    %v57 = vld [vmem:[%s1 + $0x7c] sm:$0xf]
    %v58 = vld [vmem:[%s1 + $0x80] sm:$0xf]
    %v59 = vld [vmem:[%s1 + $0x84] sm:$0xf]
    %v60 = vld [vmem:[%s1 + $0x88] sm:$0xf]
    %v61 = vld [vmem:[%s1 + $0x8c] sm:$0xf]
    %v62 = vld [vmem:[%s1 + $0x90] sm:$0xf]
    %v63 = vld [vmem:[%s1 + $0x94] sm:$0xf]
    %v64 = vld [vmem:[%s1 + $0x98] sm:$0xf]
    %v65 = vld [vmem:[%s1 + $0x9c] sm:$0xf]
    %v66 = vld [vmem:[%s1 + $0xa0] sm:$0xf]
    %v67 = vld [vmem:[%s1 + $0xa4] sm:$0xf]
    %v68 = vld [vmem:[%s1 + $0xa8] sm:$0xf]
    %v69 = vld [vmem:[%s1 + $0xac] sm:$0xf]
    %v70 = vld [vmem:[%s1 + $0xb0] sm:$0xf]
    %v71 = vld [vmem:[%s1 + $0xb4] sm:$0xf]
    %v72 = vld [vmem:[%s1 + $0xb8] sm:$0xf]
    %v73 = vld [vmem:[%s1 + $0xbc] sm:$0xf]
    %v74 = vld [vmem:[%s1 + $0xc0] sm:$0xf]
    %v75 = vld [vmem:[%s1 + $0xc4] sm:$0xf]
    %v76 = vld [vmem:[%s1 + $0xc8] sm:$0xf]
    %v77 = vld [vmem:[%s1 + $0xcc] sm:$0xf]
    %v78 = vld [vmem:[%s1 + $0xd0] sm:$0xf]
    %v79 = vld [vmem:[%s1 + $0xd4] sm:$0xf]
    %v80 = vld [vmem:[%s1 + $0xd8] sm:$0xf]
    %v81 = vld [vmem:[%s1 + $0xdc] sm:$0xf]
    %v82 = vld [vmem:[%s1 + $0xe0] sm:$0xf]
    %v83 = vld [vmem:[%s1 + $0xe4] sm:$0xf]
    %v84 = vld [vmem:[%s1 + $0xe8] sm:$0xf]
    %v85 = vld [vmem:[%s1 + $0xec] sm:$0xf]
    %v86 = vld [vmem:[%s1 + $0xf0] sm:$0xf]
    %v87 = vld [vmem:[%s1 + $0xf4] sm:$0xf]
    %v88 = vld [vmem:[%s1 + $0xf8] sm:$0xf]
    %v89 = vld [vmem:[%s1 + $0xfc] sm:$0xf]
    %v90 = vld [vmem:[%s1 + $0x100] sm:$0xf]
    %v91 = vld [vmem:[%s1 + $0x104] sm:$0xf]
    %v92 = vld [vmem:[%s1 + $0x108] sm:$0xf]
    %v93 = vld [vmem:[%s1 + $0x10c] sm:$0xf]
    %v94 = vld [vmem:[%s1 + $0x110] sm:$0xf]
    %v95 = vld [vmem:[%s1 + $0x114] sm:$0xf]
    %v96 = vld [vmem:[%s1 + $0x118] sm:$0xf]
    %v97 = vld [vmem:[%s1 + $0x11c] sm:$0xf]
    %v98 = vld [vmem:[%s1 + $0x120] sm:$0xf]
    %v99 = vld [vmem:[%s1 + $0x124] sm:$0xf]
    %v100 = vld [vmem:[%s1 + $0x128] sm:$0xf]
    %v101 = vld [vmem:[%s1 + $0x12c] sm:$0xf]
    %v102 = vld [vmem:[%s1 + $0x130] sm:$0xf]
    %v103 = vld [vmem:[%s1 + $0x134] sm:$0xf]
    %v104 = vld [vmem:[%s1 + $0x138] sm:$0xf]
    %v105 = vld [vmem:[%s1 + $0x13c] sm:$0xf]
    %v106 = vld [vmem:[%s1 + $0x140] sm:$0xf]
    %v107 = vld [vmem:[%s1 + $0x144] sm:$0xf]
    %v108 = vld [vmem:[%s1 + $0x148] sm:$0xf]
    %v109 = vld [vmem:[%s1 + $0x14c] sm:$0xf]
    %v110 = vld [vmem:[%s1 + $0x150] sm:$0xf]
    %v111 = vld [vmem:[%s1 + $0x154] sm:$0xf]
    %v112 = vld [vmem:[%s1 + $0x158] sm:$0xf]
    %v113 = vld [vmem:[%s1 + $0x15c] sm:$0xf]
    %v114 = vld [vmem:[%s1 + $0x160] sm:$0xf]
    %v115 = vld [vmem:[%s1 + $0x164] sm:$0xf]
    %v116 = vld [vmem:[%s1 + $0x168] sm:$0xf]
    %v117 = vld [vmem:[%s1 + $0x16c] sm:$0xf]
    %v118 = vld [vmem:[%s1 + $0x170] sm:$0xf]
    %v119 = vld [vmem:[%s1 + $0x174] sm:$0xf]
    %v120 = vld [vmem:[%s1 + $0x178] sm:$0xf]
    %v121 = vld [vmem:[%s1 + $0x17c] sm:$0xf]
    %v122 = vld [vmem:[%s1 + $0x180] sm:$0xf]
    %v123 = vld [vmem:[%s1 + $0x184] sm:$0xf]
    %v124 = vld [vmem:[%s1 + $0x188] sm:$0xf]
    %v125 = vld [vmem:[%s1 + $0x18c] sm:$0xf]
    %v126 = vld [vmem:[%s1 + $0x190] sm:$0xf]
    %v127 = vld [vmem:[%s1 + $0x194] sm:$0xf]
    %v128 = vld [vmem:[%s1 + $0x198] sm:$0xf]
    %v129 = vld [vmem:[%s1 + $0x19c] sm:$0xf]
    %v130 = vld [vmem:[%s1 + $0x1a0] sm:$0xf]
    %v131 = vld [vmem:[%s1 + $0x1a4] sm:$0xf]
    %v132 = vld [vmem:[%s1 + $0x1a8] sm:$0xf]
    %v133 = vld [vmem:[%s1 + $0x1ac] sm:$0xf]
    %v134 = vld [vmem:[%s1 + $0x1b0] sm:$0xf]
    %v135 = vld [vmem:[%s1 + $0x1b4] sm:$0xf]
    %v136 = vld [vmem:[%s1 + $0x1b8] sm:$0xf]
    %v137 = vld [vmem:[%s1 + $0x1bc] sm:$0xf]
    %v138 = vld [vmem:[%s1 + $0x1c0] sm:$0xf]
    %v139 = vld [vmem:[%s1 + $0x1c4] sm:$0xf]
    %v140 = vld [vmem:[%s1 + $0x1c8] sm:$0xf]
    %v141 = vld [vmem:[%s1 + $0x1cc] sm:$0xf]
    %v142 = vld [vmem:[%s1 + $0x1d0] sm:$0xf]
    %v143 = vld [vmem:[%s1 + $0x1d4] sm:$0xf]
    %v144 = vld [vmem:[%s1 + $0x1d8] sm:$0xf]
    %v145 = vld [vmem:[%s1 + $0x1dc] sm:$0xf]
    %v146 = vld [vmem:[%s1 + $0x1e0] sm:$0xf]
    %v147 = vld [vmem:[%s1 + $0x1e4] sm:$0xf]
    %v148 = vld [vmem:[%s1 + $0x1e8] sm:$0xf]
    %v149 = vld [vmem:[%s1 + $0x1ec] sm:$0xf]
    %v150 = vld [vmem:[%s1 + $0x1f0] sm:$0xf]
    %v151 = vld [vmem:[%s1 + $0x1f4] sm:$0xf]
    %v152 = vld [vmem:[%s1 + $0x1f8] sm:$0xf]
    %v153 = vld [vmem:[%s1 + $0x1fc] sm:$0xf]
    %v154 = vld [vmem:[%s2] sm:$0x1]
    %v156 = vlaneseq
    %v157 = vshrl.u32 %v156, 7
    %v158 = vsub.s32 0, %v157
    %v159 = vrot.slane %v154, %v158
    %v162 = vcombine.high %v25, %v25
    %v164 = vunpack.c.l.s4 1966171168
    %v165 = vunpack.c.0.s8 %v164
    %v166 = vlaneseq
    %v167 = vshrl.u32 %v166, 7
    %v168 = vsub.s32 %v165, %v167
    %v169 = vrot.slane %v25, %v168
    %v171 = vunpack.c.l.s4 1966171168
    %v172 = vunpack.c.0.s8 %v171
    %v173 = vlaneseq
    %v174 = vshrl.u32 %v173, 7
    %v175 = vsub.s32 %v172, %v174
    %v176 = vrot.slane %v162, %v175
    %v177 = vcombine.high %v169, %v169
    %v178 = vcombine.high %v176, %v176
    %v180 = vunpack.c.l.s4 1966171168
    %v181 = vunpack.c.0.s8 %v180
    %v182 = vlaneseq
    %v183 = vshrl.u32 %v182, 7
    %v184 = vsub.s32 %v181, %v183
    %v185 = vrot.slane %v169, %v184
    %v187 = vunpack.c.l.s4 1966171168
    %v188 = vunpack.c.0.s8 %v187
    %v189 = vlaneseq
    %v190 = vshrl.u32 %v189, 7
    %v191 = vsub.s32 %v188, %v190
    %v192 = vrot.slane %v176, %v191
    %v194 = vunpack.c.l.s4 1966171168
    %v195 = vunpack.c.0.s8 %v194
    %v196 = vlaneseq
    %v197 = vshrl.u32 %v196, 7
    %v198 = vsub.s32 %v195, %v197
    %v199 = vrot.slane %v177, %v198
    %v201 = vunpack.c.l.s4 1966171168
    %v202 = vunpack.c.0.s8 %v201
    %v203 = vlaneseq
    %v204 = vshrl.u32 %v203, 7
    %v205 = vsub.s32 %v202, %v204
    %v206 = vrot.slane %v178, %v205
    %v207 = vcombine.high %v185, %v185
    %v208 = vcombine.high %v192, %v192
    %v209 = vcombine.high %v199, %v199
    %v210 = vcombine.high %v206, %v206
    %v347 = vunpack.c.l.b16 %v26
    %v348 = vunpack.c.l.b16 %v27
    %v349 = vunpack.c.l.b16 %v28
    %v350 = vunpack.c.l.b16 %v29
    %v351 = vunpack.c.l.b16 %v30
    %v352 = vunpack.c.l.b16 %v31
    %v353 = vunpack.c.l.b16 %v32
    %v354 = vunpack.c.l.b16 %v33
    %v355 = vunpack.c.l.b16 %v34
    %v356 = vunpack.c.l.b16 %v35
    %v357 = vunpack.c.l.b16 %v36
    %v358 = vunpack.c.l.b16 %v37
    %v359 = vunpack.c.l.b16 %v38
    %v360 = vunpack.c.l.b16 %v39
    %v361 = vunpack.c.l.b16 %v40
    %v362 = vunpack.c.l.b16 %v41
    %v363 = vunpack.c.l.b16 %v42
    %v364 = vunpack.c.l.b16 %v43
    %v365 = vunpack.c.l.b16 %v44
    %v366 = vunpack.c.l.b16 %v45
    %v367 = vunpack.c.l.b16 %v46
    %v368 = vunpack.c.l.b16 %v47
    %v369 = vunpack.c.l.b16 %v48
    %v370 = vunpack.c.l.b16 %v49
    %v371 = vunpack.c.l.b16 %v50
    %v372 = vunpack.c.l.b16 %v51
    %v373 = vunpack.c.l.b16 %v52
    %v374 = vunpack.c.l.b16 %v53
    %v375 = vunpack.c.l.b16 %v54
    %v376 = vunpack.c.l.b16 %v55
    %v377 = vunpack.c.l.b16 %v56
    %v378 = vunpack.c.l.b16 %v57
    %v379 = vunpack.c.l.b16 %v58
    %v380 = vunpack.c.l.b16 %v59
    %v381 = vunpack.c.l.b16 %v60
    %v382 = vunpack.c.l.b16 %v61
    %v383 = vunpack.c.l.b16 %v62
    %v384 = vunpack.c.l.b16 %v63
    %v385 = vunpack.c.l.b16 %v64
    %v386 = vunpack.c.l.b16 %v65
    %v387 = vunpack.c.l.b16 %v66
    %v388 = vunpack.c.l.b16 %v67
    %v389 = vunpack.c.l.b16 %v68
    %v390 = vunpack.c.l.b16 %v69
    %v391 = vunpack.c.l.b16 %v70
    %v392 = vunpack.c.l.b16 %v71
    %v393 = vunpack.c.l.b16 %v72
    %v394 = vunpack.c.l.b16 %v73
    %v395 = vunpack.c.l.b16 %v74
    %v396 = vunpack.c.l.b16 %v75
    %v397 = vunpack.c.l.b16 %v76
    %v398 = vunpack.c.l.b16 %v77
    %v399 = vunpack.c.l.b16 %v78
    %v400 = vunpack.c.l.b16 %v79
    %v401 = vunpack.c.l.b16 %v80
    %v402 = vunpack.c.l.b16 %v81
    %v403 = vunpack.c.l.b16 %v82
    %v404 = vunpack.c.l.b16 %v83
    %v405 = vunpack.c.l.b16 %v84
    %v406 = vunpack.c.l.b16 %v85
    %v407 = vunpack.c.l.b16 %v86
    %v408 = vunpack.c.l.b16 %v87
    %v409 = vunpack.c.l.b16 %v88
    %v410 = vunpack.c.l.b16 %v89
    %v411 = vunpack.c.l.b16 %v90
    %v412 = vunpack.c.l.b16 %v91
    %v413 = vunpack.c.l.b16 %v92
    %v414 = vunpack.c.l.b16 %v93
    %v415 = vunpack.c.l.b16 %v94
    %v416 = vunpack.c.l.b16 %v95
    %v417 = vunpack.c.l.b16 %v96
    %v418 = vunpack.c.l.b16 %v97
    %v419 = vunpack.c.l.b16 %v98
    %v420 = vunpack.c.l.b16 %v99
    %v421 = vunpack.c.l.b16 %v100
    %v422 = vunpack.c.l.b16 %v101
    %v423 = vunpack.c.l.b16 %v102
    %v424 = vunpack.c.l.b16 %v103
    %v425 = vunpack.c.l.b16 %v104
    %v426 = vunpack.c.l.b16 %v105
    %v427 = vunpack.c.l.b16 %v106
    %v428 = vunpack.c.l.b16 %v107
    %v429 = vunpack.c.l.b16 %v108
    %v430 = vunpack.c.l.b16 %v109
    %v431 = vunpack.c.l.b16 %v110
    %v432 = vunpack.c.l.b16 %v111
    %v433 = vunpack.c.l.b16 %v112
    %v434 = vunpack.c.l.b16 %v113
    %v435 = vunpack.c.l.b16 %v114
    %v436 = vunpack.c.l.b16 %v115
    %v437 = vunpack.c.l.b16 %v116
    %v438 = vunpack.c.l.b16 %v117
    %v439 = vunpack.c.l.b16 %v118
    %v440 = vunpack.c.l.b16 %v119
    %v441 = vunpack.c.l.b16 %v120
    %v442 = vunpack.c.l.b16 %v121
    %v443 = vunpack.c.l.b16 %v122
    %v444 = vunpack.c.l.b16 %v123
    %v445 = vunpack.c.l.b16 %v124
    %v446 = vunpack.c.l.b16 %v125
    %v447 = vunpack.c.l.b16 %v126
    %v448 = vunpack.c.l.b16 %v127
    %v449 = vunpack.c.l.b16 %v128
    %v450 = vunpack.c.l.b16 %v129
    %v451 = vunpack.c.l.b16 %v130
    %v452 = vunpack.c.l.b16 %v131
    %v453 = vunpack.c.l.b16 %v132
    %v454 = vunpack.c.l.b16 %v133
    %v455 = vunpack.c.l.b16 %v134
    %v456 = vunpack.c.l.b16 %v135
    %v457 = vunpack.c.l.b16 %v136
    %v458 = vunpack.c.l.b16 %v137
    %v459 = vunpack.c.l.b16 %v138
    %v460 = vunpack.c.l.b16 %v139
    %v461 = vunpack.c.l.b16 %v140
    %v462 = vunpack.c.l.b16 %v141
    %v463 = vunpack.c.l.b16 %v142
    %v464 = vunpack.c.l.b16 %v143
    %v465 = vunpack.c.l.b16 %v144
    %v466 = vunpack.c.l.b16 %v145
    %v467 = vunpack.c.l.b16 %v146
    %v468 = vunpack.c.l.b16 %v147
    %v469 = vunpack.c.l.b16 %v148
    %v470 = vunpack.c.l.b16 %v149
    %v471 = vunpack.c.l.b16 %v150
    %v472 = vunpack.c.l.b16 %v151
    %v473 = vunpack.c.l.b16 %v152
    %v474 = vunpack.c.l.b16 %v153
    %v475 = vpack.c.b16 %v348, %v347
    %v476 = vpack.c.b16 %v350, %v349
    %v477 = vpack.c.b16 %v352, %v351
    %v478 = vpack.c.b16 %v354, %v353
    %v479 = vpack.c.b16 %v356, %v355
    %v480 = vpack.c.b16 %v358, %v357
    %v481 = vpack.c.b16 %v360, %v359
    %v482 = vpack.c.b16 %v362, %v361
    %v483 = vpack.c.b16 %v364, %v363
    %v484 = vpack.c.b16 %v366, %v365
    %v485 = vpack.c.b16 %v368, %v367
    %v486 = vpack.c.b16 %v370, %v369
    %v487 = vpack.c.b16 %v372, %v371
    %v488 = vpack.c.b16 %v374, %v373
    %v489 = vpack.c.b16 %v376, %v375
    %v490 = vpack.c.b16 %v378, %v377
    %v491 = vpack.c.b16 %v380, %v379
    %v492 = vpack.c.b16 %v382, %v381
    %v493 = vpack.c.b16 %v384, %v383
    %v494 = vpack.c.b16 %v386, %v385
    %v495 = vpack.c.b16 %v388, %v387
    %v496 = vpack.c.b16 %v390, %v389
    %v497 = vpack.c.b16 %v392, %v391
    %v498 = vpack.c.b16 %v394, %v393
    %v499 = vpack.c.b16 %v396, %v395
    %v500 = vpack.c.b16 %v398, %v397
    %v501 = vpack.c.b16 %v400, %v399
    %v502 = vpack.c.b16 %v402, %v401
    %v503 = vpack.c.b16 %v404, %v403
    %v504 = vpack.c.b16 %v406, %v405
    %v505 = vpack.c.b16 %v408, %v407
    %v506 = vpack.c.b16 %v410, %v409
    %v507 = vpack.c.b16 %v412, %v411
    %v508 = vpack.c.b16 %v414, %v413
    %v509 = vpack.c.b16 %v416, %v415
    %v510 = vpack.c.b16 %v418, %v417
    %v511 = vpack.c.b16 %v420, %v419
    %v512 = vpack.c.b16 %v422, %v421
    %v513 = vpack.c.b16 %v424, %v423
    %v514 = vpack.c.b16 %v426, %v425
    %v515 = vpack.c.b16 %v428, %v427
    %v516 = vpack.c.b16 %v430, %v429
    %v517 = vpack.c.b16 %v432, %v431
    %v518 = vpack.c.b16 %v434, %v433
    %v519 = vpack.c.b16 %v436, %v435
    %v520 = vpack.c.b16 %v438, %v437
    %v521 = vpack.c.b16 %v440, %v439
    %v522 = vpack.c.b16 %v442, %v441
    %v523 = vpack.c.b16 %v444, %v443
    %v524 = vpack.c.b16 %v446, %v445
    %v525 = vpack.c.b16 %v448, %v447
    %v526 = vpack.c.b16 %v450, %v449
    %v527 = vpack.c.b16 %v452, %v451
    %v528 = vpack.c.b16 %v454, %v453
    %v529 = vpack.c.b16 %v456, %v455
    %v530 = vpack.c.b16 %v458, %v457
    %v531 = vpack.c.b16 %v460, %v459
    %v532 = vpack.c.b16 %v462, %v461
    %v533 = vpack.c.b16 %v464, %v463
    %v534 = vpack.c.b16 %v466, %v465
    %v535 = vpack.c.b16 %v468, %v467
    %v536 = vpack.c.b16 %v470, %v469
    %v537 = vpack.c.b16 %v472, %v471
    %v538 = vpack.c.b16 %v474, %v473
    %603 = vmatprep.subr.bf16.mxu0 0
    %604 = vmatpush1.bf16.msra.mxu0 %v475
    %605 = vmatprep.subr.bf16.mxu0 0
    %606 = vmatpush1.bf16.msra.mxu0 %v476
    %607 = vmatprep.subr.bf16.mxu0 0
    %608 = vmatpush1.bf16.msra.mxu0 %v477
    %609 = vmatprep.subr.bf16.mxu0 0
    %610 = vmatpush1.bf16.msra.mxu0 %v478
    %611 = vmatprep.subr.bf16.mxu0 0
    %612 = vmatpush1.bf16.msra.mxu0 %v479
    %613 = vmatprep.subr.bf16.mxu0 0
    %614 = vmatpush1.bf16.msra.mxu0 %v480
    %615 = vmatprep.subr.bf16.mxu0 0
    %616 = vmatpush1.bf16.msra.mxu0 %v481
    %617 = vmatprep.subr.bf16.mxu0 0
    %618 = vmatpush1.bf16.msra.mxu0 %v482
    %619 = vmatprep.subr.bf16.mxu0 0
    %620 = vmatpush1.bf16.msra.mxu0 %v483
    %621 = vmatprep.subr.bf16.mxu0 0
    %622 = vmatpush1.bf16.msra.mxu0 %v484
    %623 = vmatprep.subr.bf16.mxu0 0
    %624 = vmatpush1.bf16.msra.mxu0 %v485
    %625 = vmatprep.subr.bf16.mxu0 0
    %626 = vmatpush1.bf16.msra.mxu0 %v486
    %627 = vmatprep.subr.bf16.mxu0 0
    %628 = vmatpush1.bf16.msra.mxu0 %v487
    %629 = vmatprep.subr.bf16.mxu0 0
    %630 = vmatpush1.bf16.msra.mxu0 %v488
    %631 = vmatprep.subr.bf16.mxu0 0
    %632 = vmatpush1.bf16.msra.mxu0 %v489
    %633 = vmatprep.subr.bf16.mxu0 0
    %634 = vmatpush1.bf16.msra.mxu0 %v490
    %635 = vmatprep.mubr.bf16.mxu0 %v199
    %636 = vmatmul.mubr.bf16.gmra.mrb[0].mxu0 %v185
    %v637 = vpop.f32.mrb[0].mxu0
    %v638 = vadd.f32 %v159, %v637
    %v639 = vpop.f32.mrb[0].mxu0
    %v640 = vpop.f32.mrb[0].mxu0
    %v641 = vpop.f32.mrb[0].mxu0
    %642 = vdwg.mxu0
    %643 = vmatprep.subr.bf16.mxu0 0
    %644 = vmatpush1.bf16.msra.mxu0 %v491
    %645 = vmatprep.subr.bf16.mxu0 0
    %646 = vmatpush1.bf16.msra.mxu0 %v492
    %647 = vmatprep.subr.bf16.mxu0 0
    %648 = vmatpush1.bf16.msra.mxu0 %v493
    %649 = vmatprep.subr.bf16.mxu0 0
    %650 = vmatpush1.bf16.msra.mxu0 %v494
    %651 = vmatprep.subr.bf16.mxu0 0
    %652 = vmatpush1.bf16.msra.mxu0 %v495
    %653 = vmatprep.subr.bf16.mxu0 0
    %654 = vmatpush1.bf16.msra.mxu0 %v496
    %655 = vmatprep.subr.bf16.mxu0 0
    %656 = vmatpush1.bf16.msra.mxu0 %v497
    %657 = vmatprep.subr.bf16.mxu0 0
    %658 = vmatpush1.bf16.msra.mxu0 %v498
    %659 = vmatprep.subr.bf16.mxu0 0
    %660 = vmatpush1.bf16.msra.mxu0 %v499
    %661 = vmatprep.subr.bf16.mxu0 0
    %662 = vmatpush1.bf16.msra.mxu0 %v500
    %663 = vmatprep.subr.bf16.mxu0 0
    %664 = vmatpush1.bf16.msra.mxu0 %v501
    %665 = vmatprep.subr.bf16.mxu0 0
    %666 = vmatpush1.bf16.msra.mxu0 %v502
    %667 = vmatprep.subr.bf16.mxu0 0
    %668 = vmatpush1.bf16.msra.mxu0 %v503
    %669 = vmatprep.subr.bf16.mxu0 0
    %670 = vmatpush1.bf16.msra.mxu0 %v504
    %671 = vmatprep.subr.bf16.mxu0 0
    %672 = vmatpush1.bf16.msra.mxu0 %v505
    %673 = vmatprep.subr.bf16.mxu0 0
    %674 = vmatpush1.bf16.msra.mxu0 %v506
    %675 = vmatprep.mubr.bf16.mxu0 %v209
    %676 = vmatmul.mubr.bf16.gmra.mrb[0].mxu0 %v207
    %v677 = vpop.f32.mrb[0].mxu0
    %v678 = vadd.f32 %v638, %v677
    %v679 = vpop.f32.mrb[0].mxu0
    %v680 = vpop.f32.mrb[0].mxu0
    %v681 = vpop.f32.mrb[0].mxu0
    %682 = vdwg.mxu0
    %683 = vmatprep.subr.bf16.mxu0 0
    %684 = vmatpush1.bf16.msra.mxu0 %v507
    %685 = vmatprep.subr.bf16.mxu0 0
    %686 = vmatpush1.bf16.msra.mxu0 %v508
    %687 = vmatprep.subr.bf16.mxu0 0
    %688 = vmatpush1.bf16.msra.mxu0 %v509
    %689 = vmatprep.subr.bf16.mxu0 0
    %690 = vmatpush1.bf16.msra.mxu0 %v510
    %691 = vmatprep.subr.bf16.mxu0 0
    %692 = vmatpush1.bf16.msra.mxu0 %v511
    %693 = vmatprep.subr.bf16.mxu0 0
    %694 = vmatpush1.bf16.msra.mxu0 %v512
    %695 = vmatprep.subr.bf16.mxu0 0
    %696 = vmatpush1.bf16.msra.mxu0 %v513
    %697 = vmatprep.subr.bf16.mxu0 0
    %698 = vmatpush1.bf16.msra.mxu0 %v514
    %699 = vmatprep.subr.bf16.mxu0 0
    %700 = vmatpush1.bf16.msra.mxu0 %v515
    %701 = vmatprep.subr.bf16.mxu0 0
    %702 = vmatpush1.bf16.msra.mxu0 %v516
    %703 = vmatprep.subr.bf16.mxu0 0
    %704 = vmatpush1.bf16.msra.mxu0 %v517
    %705 = vmatprep.subr.bf16.mxu0 0
    %706 = vmatpush1.bf16.msra.mxu0 %v518
    %707 = vmatprep.subr.bf16.mxu0 0
    %708 = vmatpush1.bf16.msra.mxu0 %v519
    %709 = vmatprep.subr.bf16.mxu0 0
    %710 = vmatpush1.bf16.msra.mxu0 %v520
    %711 = vmatprep.subr.bf16.mxu0 0
    %712 = vmatpush1.bf16.msra.mxu0 %v521
    %713 = vmatprep.subr.bf16.mxu0 0
    %714 = vmatpush1.bf16.msra.mxu0 %v522
    %715 = vmatprep.mubr.bf16.mxu0 %v206
    %716 = vmatmul.mubr.bf16.gmra.mrb[0].mxu0 %v192
    %v717 = vpop.f32.mrb[0].mxu0
    %v718 = vadd.f32 %v678, %v717
    %v719 = vpop.f32.mrb[0].mxu0
    %v720 = vpop.f32.mrb[0].mxu0
    %v721 = vpop.f32.mrb[0].mxu0
    %722 = vdwg.mxu0
    %723 = vmatprep.subr.bf16.mxu0 0
    %724 = vmatpush1.bf16.msra.mxu0 %v523
    %725 = vmatprep.subr.bf16.mxu0 0
    %726 = vmatpush1.bf16.msra.mxu0 %v524
    %727 = vmatprep.subr.bf16.mxu0 0
    %728 = vmatpush1.bf16.msra.mxu0 %v525
    %729 = vmatprep.subr.bf16.mxu0 0
    %730 = vmatpush1.bf16.msra.mxu0 %v526
    %731 = vmatprep.subr.bf16.mxu0 0
    %732 = vmatpush1.bf16.msra.mxu0 %v527
    %733 = vmatprep.subr.bf16.mxu0 0
    %734 = vmatpush1.bf16.msra.mxu0 %v528
    %735 = vmatprep.subr.bf16.mxu0 0
    %736 = vmatpush1.bf16.msra.mxu0 %v529
    %737 = vmatprep.subr.bf16.mxu0 0
    %738 = vmatpush1.bf16.msra.mxu0 %v530
    %739 = vmatprep.subr.bf16.mxu0 0
    %740 = vmatpush1.bf16.msra.mxu0 %v531
    %741 = vmatprep.subr.bf16.mxu0 0
    %742 = vmatpush1.bf16.msra.mxu0 %v532
    %743 = vmatprep.subr.bf16.mxu0 0
    %744 = vmatpush1.bf16.msra.mxu0 %v533
    %745 = vmatprep.subr.bf16.mxu0 0
    %746 = vmatpush1.bf16.msra.mxu0 %v534
    %747 = vmatprep.subr.bf16.mxu0 0
    %748 = vmatpush1.bf16.msra.mxu0 %v535
    %749 = vmatprep.subr.bf16.mxu0 0
    %750 = vmatpush1.bf16.msra.mxu0 %v536
    %751 = vmatprep.subr.bf16.mxu0 0
    %752 = vmatpush1.bf16.msra.mxu0 %v537
    %753 = vmatprep.subr.bf16.mxu0 0
    %754 = vmatpush1.bf16.msra.mxu0 %v538
    %755 = vmatprep.mubr.bf16.mxu0 %v210
    %756 = vmatmul.mubr.bf16.gmra.mrb[0].mxu0 %v208
    %v757 = vpop.f32.mrb[0].mxu0
    %v758 = vadd.f32 %v718, %v757
    %v759 = vpop.f32.mrb[0].mxu0
    %v760 = vpop.f32.mrb[0].mxu0
    %v761 = vpop.f32.mrb[0].mxu0
    %762 = vdwg.mxu0
    %vm763 = vcmp.gt.f32.partialorder %v758, 0.0
    %v764 = vmul.f32 %v758, 0.2
    %v765 = vsel %vm763, %v758, %v764
    %v766 = vpack.c.bf16 %v765, %v765
    %v767 = vld [vmem:[%s3] sm:$0xf]
    %v768 = vld [vmem:[%s3 + $0x4] sm:$0xf]
    %v769 = vld [vmem:[%s3 + $0x8] sm:$0xf]
    %v770 = vld [vmem:[%s3 + $0xc] sm:$0xf]
    %v771 = vld [vmem:[%s4] sm:$0x1]
    %v773 = vlaneseq
    %v774 = vshrl.u32 %v773, 7
    %v775 = vsub.s32 0, %v774
    %v776 = vrot.slane %v771, %v775
    %v782 = vunpack.c.l.b16 %v767
    %v783 = vunpack.c.l.b16 %v768
    %v784 = vunpack.c.l.b16 %v769
    %v785 = vunpack.c.l.b16 %v770
    %v786 = vpack.c.b16 %v783, %v782
    %v787 = vpack.c.b16 %v785, %v784
    %vm790 = vcmask 261120
    %v792 = vsel %vm790, %v766, 0
    %794 = vmatprep.subr.bf16.mxu0 0
    %795 = vmatpush1.bf16.msra.mxu0 %v786
    %796 = vmatprep.subr.bf16.mxu0 0
    %797 = vmatpush1.bf16.msra.mxu0 %v787
    %798 = vmatprep.subr.bf16.mxu0 0
    %799 = vmatpush1.bf16.msra.mxu0 0
    %800 = vmatprep.subr.bf16.mxu0 0
    %801 = vmatpush1.bf16.msra.mxu0 0
    %802 = vmatprep.subr.bf16.mxu0 0
    %803 = vmatpush1.bf16.msra.mxu0 0
    %804 = vmatprep.subr.bf16.mxu0 0
    %805 = vmatpush1.bf16.msra.mxu0 0
    %806 = vmatprep.subr.bf16.mxu0 0
    %807 = vmatpush1.bf16.msra.mxu0 0
    %808 = vmatprep.subr.bf16.mxu0 0
    %809 = vmatpush1.bf16.msra.mxu0 0
    %810 = vmatprep.subr.bf16.mxu0 0
    %811 = vmatpush1.bf16.msra.mxu0 0
    %812 = vmatprep.subr.bf16.mxu0 0
    %813 = vmatpush1.bf16.msra.mxu0 0
    %814 = vmatprep.subr.bf16.mxu0 0
    %815 = vmatpush1.bf16.msra.mxu0 0
    %816 = vmatprep.subr.bf16.mxu0 0
    %817 = vmatpush1.bf16.msra.mxu0 0
    %818 = vmatprep.subr.bf16.mxu0 0
    %819 = vmatpush1.bf16.msra.mxu0 0
    %820 = vmatprep.subr.bf16.mxu0 0
    %821 = vmatpush1.bf16.msra.mxu0 0
    %822 = vmatprep.subr.bf16.mxu0 0
    %823 = vmatpush1.bf16.msra.mxu0 0
    %824 = vmatprep.subr.bf16.mxu0 0
    %825 = vmatpush1.bf16.msra.mxu0 0
    %826 = vmatprep.mubr.bf16.mxu0 0
    %827 = vmatmul.mubr.bf16.gmra.mrb[0].mxu0 %v792
    %v828 = vpop.f32.mrb[0].mxu0
    %v829 = vadd.f32 %v776, %v828
    %v830 = vpop.f32.mrb[0].mxu0
    %v831 = vpop.f32.mrb[0].mxu0
    %v832 = vpop.f32.mrb[0].mxu0
    %833 = vdwg.mxu0
    %v834 = vmul.f32 %v829, 0.5
    %v835 = vmul.f32 %v834, 1.442695
    %v836 = vpow.pop %v835
    %v837 = vld [vmem:[%s5] sm:$0x3]
    %839 = vrot.lane.b32.xlu0 %v837, 16
    %v840 = vpop.permute.xlu0 %839
    %v842 = vmul.f32 %v836, %v840
    %844 = vrot.lane.b32.xlu0 %v842, 112
    %v845 = vpop.permute.xlu0 %844
    %v847 = vadd.f32 %v829, %v845
    %849 = vrot.lane.b32.xlu0 %v829, 16
    %v850 = vpop.permute.xlu0 %849
    %vm852 = vcmask 130048
    %v853 = vsel %vm852, %v847, %v850
    %v854 = vsel %vm790, %v853, %v850
    %vm855 = vcmask 386048
    %856 = vst.msk [vmem:[#allocation2] sm:$0x3] %vm855, %v854
    // Predicated region
    $region26: #{tpu_custom_call.1} parent=1 // pred_check
      _
    $region27: #{tpu_custom_call.1} parent=1 // pred_check_branch
      %858 = sbr.rel (0) target = $region29
    $region28: #{tpu_custom_call.1} parent=1 // pred_region
      %s860 = ssub.s32 32, 32
      %861 = vsyncadd [#allocation3], %s860
      %s863 = sshll.u32 [#allocation2], 4
      %s864 = int_to_ptr.vmem [resolvable:$true] %s863
      %866 = dma.vmem_to_hbm [thread:$0]  %s864, 32, %s6, [#allocation3]
    $region29: #{tpu_custom_call.1} parent=1 // pred_fallthru
      _
    // Predicated region
    $region30: #{tpu_custom_call.1} parent=1 // pred_check
      _
    $region31: #{tpu_custom_call.1} parent=1 // pred_check_branch
      %868 = sbr.rel (0) target = $region33
    $region32: #{tpu_custom_call.1} parent=1 // pred_region
      %869 = dma.done [#allocation3], 32
    $region33: #{tpu_custom_call.1} parent=1 // pred_fallthru
      _
    %870 = vsyncpa [#allocation3], 1

</llo_original>
